<compile_context>
chip_gen: v7x
topology: tpu7x:2x2x1
jax: 0.10.0
libtpu: 0.0.40
codegen_flags: <defaults>
</compile_context>

<pallas_src>
import functools

import jax
import jax.numpy as jnp
from jax import lax
from jax.experimental import pallas as pl
from jax.experimental.pallas import tpu as pltpu


# ----------------------------------------------------------------------------
# Pallas LayerNorm2d kernel
# ----------------------------------------------------------------------------
def _round_up(x, m):
    return ((x + m - 1) // m) * m


def _layernorm2d_kernel(x_ref, w_ref, b_ref, o_ref, *, eps):
    # x_ref: (1, C, T_HW) tile; w_ref / b_ref: (1, C, 1) resident constants.
    x = x_ref[...].astype(jnp.float32)
    mu = jnp.mean(x, axis=1, keepdims=True)                     # (1, 1, T_HW)
    # Single-pass (biased) variance: mean(x^2) - mu^2; clamp tiny negative fp error.
    var = jnp.maximum(jnp.mean(x * x, axis=1, keepdims=True) - mu * mu, 0.0)
    y = (x - mu) * lax.rsqrt(var + eps)                         # (1, C, T_HW)
    o_ref[...] = (w_ref[...] * y + b_ref[...]).astype(o_ref.dtype)


def _choose_tile_hw(C, HW, dtype_bytes, budget_bytes=24 * 1024 * 1024):
    """Largest HW tile (multiple of 128) whose pipelined footprint fits the budget."""
    # Per HW column per step: 2 double-buffered input + 2 output buffers (native
    # dtype) plus ~2 f32-wide temporaries of headroom.
    per_col = C * (4 * dtype_bytes + 8)
    t = max(128, (budget_bytes // max(per_col, 1)) // 128 * 128)
    return min(t, _round_up(HW, 128))


def layer_norm_2d(x, weight, bias, eps=1e-6):
    """x: (N, C, H, W); weight, bias: (C,). Matches LayerNormFunction.forward."""
    N, C, H, W = x.shape
    HW = H * W
    dtype_bytes = jnp.dtype(x.dtype).itemsize

    t_hw = _choose_tile_hw(C, HW, dtype_bytes)
    hw_pad = _round_up(HW, t_hw)

    x3 = x.reshape(N, C, HW)
    if hw_pad != HW:
        # Pad the spatial axis -> every block is full-width (no masked stores).
        # Reduction is over C, so padded columns never pollute real statistics.
        x3 = jnp.pad(x3, ((0, 0), (0, 0), (0, hw_pad - HW)))

    w3 = weight.reshape(1, C, 1).astype(jnp.float32)
    b3 = bias.reshape(1, C, 1).astype(jnp.float32)

    kernel = functools.partial(_layernorm2d_kernel, eps=float(eps))

    cost = pl.CostEstimate(
        flops=7 * N * C * hw_pad,
        transcendentals=N * hw_pad,
        bytes_accessed=2 * N * C * hw_pad * dtype_bytes + 2 * C * 4,
    )

    out = pl.pallas_call(
        kernel,
        out_shape=jax.ShapeDtypeStruct((N, C, hw_pad), x.dtype),
        grid_spec=pltpu.PrefetchScalarGridSpec(
            num_scalar_prefetch=0,
            grid=(N, hw_pad // t_hw),
            in_specs=[
                pl.BlockSpec((1, C, t_hw), lambda n, h: (n, 0, h)),
                pl.BlockSpec((1, C, 1), lambda n, h: (0, 0, 0)),
                pl.BlockSpec((1, C, 1), lambda n, h: (0, 0, 0)),
            ],
            out_specs=pl.BlockSpec((1, C, t_hw), lambda n, h: (n, 0, h)),
        ),
        compiler_params=pltpu.CompilerParams(
            dimension_semantics=("parallel", "parallel"),
            vmem_limit_bytes=64 * 1024 * 1024,
        ),
        cost_estimate=cost,
    )(x3, w3, b3)

    if hw_pad != HW:
        out = out[:, :, :HW]
    return out.reshape(N, C, H, W)


# ----------------------------------------------------------------------------
# BasicUpMerge forward (NAFBlocks use the Pallas LayerNorm2d kernel)
# TODO(synk): Conv2d (1x1 / depthwise 3x3 / 3x3), PixelShuffle, concat and the
# SCA global-average-pool use XLA-native lax/jnp ops rather than Pallas kernels.
# ----------------------------------------------------------------------------
def _conv2d(x, w, b=None, *, stride=(1, 1), padding=(0, 0), dilation=(1, 1), groups=1):
    out = lax.conv_general_dilated(
        x, w,
        window_strides=stride,
        padding=((padding[0], padding[0]), (padding[1], padding[1])),
        rhs_dilation=dilation,
        dimension_numbers=("NCHW", "OIHW", "NCHW"),
        feature_group_count=groups,
    )
    if b is not None:
        out = out + b.reshape(1, -1, 1, 1)
    return out


def _pixel_shuffle(x, r):
    N, C, H, W = x.shape
    Co = C // (r * r)
    x = x.reshape(N, Co, r, r, H, W)
    x = jnp.transpose(x, (0, 1, 4, 2, 5, 3))
    return x.reshape(N, Co, H * r, W * r)


def _simple_gate(x):
    c = x.shape[1] // 2
    return x[:, :c] * x[:, c:]


def _init_conv_w(key, o, i, kh, kw, dtype=jnp.float32):
    fan_in = i * kh * kw
    return (jax.random.normal(key, (o, i, kh, kw), dtype) / jnp.sqrt(fan_in)).astype(dtype)


def init_nafblock_params(key, c, dw_expand=2, ffn_expand=2, dtype=jnp.float32):
    dw = c * dw_expand
    ffn = ffn_expand * c
    ks = jax.random.split(key, 6)
    return dict(
        conv1_w=_init_conv_w(ks[0], dw, c, 1, 1, dtype), conv1_b=jnp.zeros((dw,), dtype),
        conv2_w=_init_conv_w(ks[1], dw, 1, 3, 3, dtype), conv2_b=jnp.zeros((dw,), dtype),
        conv3_w=_init_conv_w(ks[2], c, dw // 2, 1, 1, dtype), conv3_b=jnp.zeros((c,), dtype),
        sca_w=_init_conv_w(ks[3], dw // 2, dw // 2, 1, 1, dtype), sca_b=jnp.zeros((dw // 2,), dtype),
        conv4_w=_init_conv_w(ks[4], ffn, c, 1, 1, dtype), conv4_b=jnp.zeros((ffn,), dtype),
        conv5_w=_init_conv_w(ks[5], c, ffn // 2, 1, 1, dtype), conv5_b=jnp.zeros((c,), dtype),
        norm1_w=jnp.ones((c,), dtype), norm1_b=jnp.zeros((c,), dtype),
        norm2_w=jnp.ones((c,), dtype), norm2_b=jnp.zeros((c,), dtype),
        beta=jnp.zeros((1, c, 1, 1), dtype), gamma=jnp.zeros((1, c, 1, 1), dtype),
    )


def nafblock_forward(p, inp, eps=1e-6):
    x = layer_norm_2d(inp, p["norm1_w"], p["norm1_b"], eps)
    x = _conv2d(x, p["conv1_w"], p["conv1_b"])
    dw = p["conv2_w"].shape[0]
    x = _conv2d(x, p["conv2_w"], p["conv2_b"], padding=(1, 1), groups=dw)
    x = _simple_gate(x)
    sca = jnp.mean(x, axis=(2, 3), keepdims=True)
    sca = _conv2d(sca, p["sca_w"], p["sca_b"])
    x = x * sca
    x = _conv2d(x, p["conv3_w"], p["conv3_b"])
    y = inp + x * p["beta"]
    x = _conv2d(layer_norm_2d(y, p["norm2_w"], p["norm2_b"], eps), p["conv4_w"], p["conv4_b"])
    x = _simple_gate(x)
    x = _conv2d(x, p["conv5_w"], p["conv5_b"])
    return y + x * p["gamma"]


def init_basic_up_merge_params(key, in_channel, out_channel, pixel_shuffle_ratio=2, nafblocks=2):
    channel = in_channel // pixel_shuffle_ratio
    keys = jax.random.split(key, nafblocks + 1)
    naf = [init_nafblock_params(keys[i], channel) for i in range(nafblocks)]
    conv_w = _init_conv_w(keys[-1], out_channel, channel, 3, 3)
    return dict(naf=naf, conv_w=conv_w, ratio=pixel_shuffle_ratio)


def basic_up_merge_forward(params, x1, x2, eps=1e-6):
    x = _pixel_shuffle(x1, params["ratio"])
    out = jnp.concatenate([x, x2], axis=1)
    for p in params["naf"]:
        out = nafblock_forward(p, out, eps)
    out = _conv2d(out, params["conv_w"], None, padding=(1, 1))  # BasicConv2d (no bias)
    return out


# ----------------------------------------------------------------------------
if __name__ == "__main__":
    key = jax.random.PRNGKey(0)
    k_x1, k_x2, k_p, k_ln, k_w, k_b = jax.random.split(key, 6)

    # BasicUpMerge(in_channel=8, out_channel=8, pixelShuffleRatio=2, nafblock=2):
    # x1 (2, 8, 8, 8) -> pixel_shuffle(2) -> (2, 2, 16, 16); x2 (2, 2, 16, 16);
    # concat -> channel = 4; output (2, 8, 16, 16).
    N, in_ch, out_ch, H, W = 2, 8, 8, 8, 8
    x1 = jax.random.normal(k_x1, (N, in_ch, H, W), dtype=jnp.float32)
    x2 = jax.random.normal(k_x2, (N, in_ch // 4, 2 * H, 2 * W), dtype=jnp.float32)
    eps = 1e-6

    # 1) Verify the Pallas LayerNorm2d kernel against a pure-JAX reference.
    C = in_ch // 2
    xln = jax.random.normal(k_ln, (N, C, 2 * H, 2 * W), dtype=jnp.float32)
    wln = 1.0 + 0.1 * jax.random.normal(k_w, (C,), dtype=jnp.float32)
    bln = 0.1 * jax.random.normal(k_b, (C,), dtype=jnp.float32)
    y = jax.block_until_ready(layer_norm_2d(xln, wln, bln, eps))
    mu = jnp.mean(xln, axis=1, keepdims=True)
    var = jnp.mean((xln - mu) ** 2, axis=1, keepdims=True)
    y_ref = wln.reshape(1, C, 1, 1) * (xln - mu) / jnp.sqrt(var + eps) + bln.reshape(1, C, 1, 1)
    assert jnp.allclose(y, y_ref, atol=1e-4, rtol=1e-4), "LayerNorm2d kernel mismatch"

    # 2) Run the full BasicUpMerge forward (NAF blocks call the Pallas LayerNorm).
    params = init_basic_up_merge_params(k_p, in_ch, out_ch)
    out = jax.block_until_ready(basic_up_merge_forward(params, x1, x2, eps))
    assert out.shape == (N, out_ch, 2 * H, 2 * W), out.shape
    assert bool(jnp.all(jnp.isfinite(out)))

    print("KERNEL_OK")
</pallas_src>

<mosaic_0001>
module attributes {stable_mosaic.version = 11 : i64} {
  func.func @_layernorm2d_kernel(%arg0: i32, %arg1: i32, %arg2: memref<1x4x256xf32, #tpu.memory_space<vmem>>, %arg3: memref<1x4x1xf32, #tpu.memory_space<vmem>>, %arg4: memref<1x4x1xf32, #tpu.memory_space<vmem>>, %arg5: memref<1x4x256xf32, #tpu.memory_space<vmem>>) attributes {dimension_semantics = [#tpu.dimension_semantics<parallel>, #tpu.dimension_semantics<parallel>], iteration_bounds = array<i64: 2, 1>, scalar_prefetch = 0 : i64, scratch_operands = 0 : i64, tpu.core_type = #tpu.core_type<tc>, window_params = [{transform_indices = @transform_0, window_bounds = array<i64: 1, 4, 256>}, {pipeline_mode = #tpu.pipeline_mode<synchronous>, transform_indices = @transform_1, window_bounds = array<i64: 1, 4, 1>}, {pipeline_mode = #tpu.pipeline_mode<synchronous>, transform_indices = @transform_2, window_bounds = array<i64: 1, 4, 1>}, {transform_indices = @transform_3, window_bounds = array<i64: 1, 4, 256>}]} {
    %c0 = arith.constant 0 : index
    %c0_0 = arith.constant 0 : index
    %c0_1 = arith.constant 0 : index
    %0 = vector.load %arg2[%c0, %c0_0, %c0_1] : memref<1x4x256xf32, #tpu.memory_space<vmem>>, vector<1x4x256xf32>
    %cst = arith.constant dense<0.000000e+00> : vector<1x256xf32>
    %1 = vector.multi_reduction <add>, %0, %cst [1] : vector<1x4x256xf32> to vector<1x256xf32>
    %2 = vector.shape_cast %1 : vector<1x256xf32> to vector<1x1x256xf32>
    %cst_2 = arith.constant 4.000000e+00 : f32
    %3 = vector.broadcast %cst_2 : f32 to vector<1x1x256xf32>
    %4 = arith.divf %2, %3 : vector<1x1x256xf32>
    %5 = arith.mulf %0, %0 : vector<1x4x256xf32>
    %cst_3 = arith.constant dense<0.000000e+00> : vector<1x256xf32>
    %6 = vector.multi_reduction <add>, %5, %cst_3 [1] : vector<1x4x256xf32> to vector<1x256xf32>
    %7 = vector.shape_cast %6 : vector<1x256xf32> to vector<1x1x256xf32>
    %cst_4 = arith.constant 4.000000e+00 : f32
    %8 = vector.broadcast %cst_4 : f32 to vector<1x1x256xf32>
    %9 = arith.divf %7, %8 : vector<1x1x256xf32>
    %10 = arith.mulf %4, %4 : vector<1x1x256xf32>
    %11 = arith.subf %9, %10 : vector<1x1x256xf32>
    %cst_5 = arith.constant 0.000000e+00 : f32
    %12 = vector.broadcast %cst_5 : f32 to vector<1x1x256xf32>
    %13 = arith.maximumf %11, %12 : vector<1x1x256xf32>
    %14 = vector.broadcast %4 : vector<1x1x256xf32> to vector<1x4x256xf32>
    %15 = arith.subf %0, %14 : vector<1x4x256xf32>
    %cst_6 = arith.constant 9.99999997E-7 : f32
    %16 = vector.broadcast %cst_6 : f32 to vector<1x1x256xf32>
    %17 = arith.addf %13, %16 : vector<1x1x256xf32>
    %18 = math.rsqrt %17 : vector<1x1x256xf32>
    %19 = vector.broadcast %18 : vector<1x1x256xf32> to vector<1x4x256xf32>
    %20 = arith.mulf %15, %19 : vector<1x4x256xf32>
    %c0_7 = arith.constant 0 : index
    %c0_8 = arith.constant 0 : index
    %c0_9 = arith.constant 0 : index
    %21 = vector.load %arg3[%c0_7, %c0_8, %c0_9] : memref<1x4x1xf32, #tpu.memory_space<vmem>>, vector<1x4x1xf32>
    %22 = vector.broadcast %21 : vector<1x4x1xf32> to vector<1x4x256xf32>
    %23 = arith.mulf %22, %20 : vector<1x4x256xf32>
    %c0_10 = arith.constant 0 : index
    %c0_11 = arith.constant 0 : index
    %c0_12 = arith.constant 0 : index
    %24 = vector.load %arg4[%c0_10, %c0_11, %c0_12] : memref<1x4x1xf32, #tpu.memory_space<vmem>>, vector<1x4x1xf32>
    %25 = vector.broadcast %24 : vector<1x4x1xf32> to vector<1x4x256xf32>
    %26 = arith.addf %23, %25 : vector<1x4x256xf32>
    %c0_13 = arith.constant 0 : index
    %c0_14 = arith.constant 0 : index
    %c0_15 = arith.constant 0 : index
    %27 = vector.load %arg5[%c0_13, %c0_14, %c0_15] : memref<1x4x256xf32, #tpu.memory_space<vmem>>, vector<1x4x256xf32>
    tpu.vector_store %arg5[%c0_13, %c0_14, %c0_15], %26 {strides = array<i32>} : memref<1x4x256xf32, #tpu.memory_space<vmem>>, vector<1x4x256xf32>,
    return
  }
  func.func @transform_0(%arg0: i32, %arg1: i32) -> (i32, i32, i32) {
    %c0_i32 = arith.constant 0 : i32
    %c0_i32_0 = arith.constant 0 : i32
    return %arg0, %c0_i32, %arg1 : i32, i32, i32
  }
  func.func @transform_1(%arg0: i32, %arg1: i32) -> (i32, i32, i32) {
    %c0_i32 = arith.constant 0 : i32
    %c0_i32_0 = arith.constant 0 : i32
    %c0_i32_1 = arith.constant 0 : i32
    %c0_i32_2 = arith.constant 0 : i32
    return %c0_i32, %c0_i32_0, %c0_i32_1 : i32, i32, i32
  }
  func.func @transform_2(%arg0: i32, %arg1: i32) -> (i32, i32, i32) {
    %c0_i32 = arith.constant 0 : i32
    %c0_i32_0 = arith.constant 0 : i32
    %c0_i32_1 = arith.constant 0 : i32
    %c0_i32_2 = arith.constant 0 : i32
    return %c0_i32, %c0_i32_0, %c0_i32_1 : i32, i32, i32
  }
  func.func @transform_3(%arg0: i32, %arg1: i32) -> (i32, i32, i32) {
    %c0_i32 = arith.constant 0 : i32
    %c0_i32_0 = arith.constant 0 : i32
    return %arg0, %c0_i32, %arg1 : i32, i32, i32
  }
}

</mosaic_0001>

<llo_original>
// kernel: tpu_custom_call.1
$region0: #{tpu_custom_call.1}
  #allocation0 [shape = 'u32[]', space=smem, size = 0x4, offset = 0x4, fixed_abs, tag = 'smem constant byte address 0x4 - core index']
  #allocation1 [shape = 'u32[144,128]{1,0:T(1,128)}', space=vmem, size = 0x12000, scoped, tag = 'internal scratch']
  %s0 = inlined_call_operand.hbm [shape: f32[2,4,256], index: 0, kind: input, shape index: {}]
  %s1 = inlined_call_operand.hbm [shape: f32[1,4,1], index: 1, kind: input, shape index: {}]
  %s2 = inlined_call_operand.hbm [shape: f32[1,4,1], index: 2, kind: input, shape index: {}]
  %s3 = inlined_call_operand.hbm [shape: f32[2,4,256], index: 3, kind: output, shape index: {}]
  %s4 = sld [smem:[#allocation0]]
  $region57: #{tpu_custom_call.1} parent=0
    _
  %s6 = ssub.s32 1, %s4
  %s7 = scalar_select 0, %s6, %s4
  $region1: #{tpu_custom_call.1} parent=0
    #allocation2 [shape = 'u8[8192]{0}', space=vmem, size = 0x2000, scoped, tag = 'input window, operand 0']
    #allocation3 [shape = 's32[2]{0}', space=sflag, size = 0x8, scoped, tag = 'scoped memory for tpu_custom_call.1']
    #allocation4 [shape = 's32[2]{0}', space=sflag, size = 0x8, scoped, tag = 'scoped memory for tpu_custom_call.1']
    #allocation5 [shape = 'u8[2048]{0}', space=vmem, size = 0x800, scoped, tag = 'input window, operand 1, single buffered']
    #allocation6 [shape = 's32[1]{0}', space=sflag, size = 0x4, scoped, tag = 'scoped memory for tpu_custom_call.1']
    #allocation7 [shape = 'u8[2048]{0}', space=vmem, size = 0x800, scoped, tag = 'input window, operand 2, single buffered']
    #allocation8 [shape = 'u8[8192]{0}', space=vmem, size = 0x2000, scoped, tag = 'output window, operand 0']
    %8 = vsyncpa [#allocation3], 0
    %s9 = scalar_lea.sflag [#allocation3], 1
    %10 = vsyncpa %s9, 0
    %11 = vsyncpa [#allocation6], 0
    %12 = vsyncpa [#allocation4], 0
    %s13 = scalar_lea.sflag [#allocation4], 1
    %14 = vsyncpa %s13, 0
    loop: start=0, step=1, limit=4
    $region2: #{tpu_custom_call.1} parent=1 // loop_pre_header
      _
    $region3: #{tpu_custom_call.1} parent=1 // loop_header
      %s16 = sphi 0, %s20
      %p17 = scmp.ge.s32.totalorder %s16, 4
      %s23 = sphi 0, %s35
      %s24 = sphi 0, %s31
      %s25 = sphi 0, %s23
      %s26 = sphi 0, %s24
      %s27 = sphi 0, %s25
      %s28 = sphi 0, %s26
      %s40 = sphi 0, %s42
      %s43 = sphi 0, %s40
      %s44 = sphi 0, %s43
      %s60 = sphi 0, %s44
      %s64 = sphi 0, %s64
      %s66 = sphi 0, %s64
      %s67 = sphi 0, %s66
      %s81 = sphi 0, %s67
      %s85 = sphi 0, %s85
      %s87 = sphi 0, %s85
      %s88 = sphi 0, %s87
      %s102 = sphi 0, %s88
      %s110 = sphi 0, %s112
      %s113 = sphi 0, %s110
      %s114 = sphi 0, %s113
      %s130 = sphi 0, %s114
    $region4: #{tpu_custom_call.1} parent=1 // loop_header_branch
      %19 = sbr.rel (%p17) target = $region8
    $region5: #{tpu_custom_call.1} parent=1 // loop_body
      %s21 = ssub.s32 %s16, 1
      %s22 = ssub.s32 %s16, 2
      %s29 = sadd.s32 1, %s24
      %p30 = scmp.ge.s32.totalorder %s29, 1
      %s31 = scalar_select %p30, 0, %s29
      %s32 = sadd.s32 1, %s23
      %s33 = scalar_select %p30, %s32, %s23
      %p34 = scmp.ge.s32.totalorder %s33, 2
      %s35 = scalar_select %p34, 0, %s33
      %s36 = ssub.s32 %s23, %s35
      %s37 = ssub.s32 %s24, %s31
      %s38 = sor.u32 %s36, %s37
      %p39 = scmp.eq.s32.totalorder %s38, 0
      %s41 = sadd.s32 %s40, 1
      %s42 = scalar_select %p39, %s40, %s41
      %p45 = pneg %p39
      %p46 = scmp.eq.s32.totalorder %s16, 1
      %p47 = por %p45, %p46
      %p48 = scmp.ne.s32.totalorder %s40, %s43
      %p49 = scmp.eq.s32.totalorder %s16, 0
      %p50 = por %p48, %p49
      %p51 = scmp.ne.s32.totalorder %s40, %s43
      %p52 = scmp.eq.s32.totalorder %s21, 1
      %p53 = por %p51, %p52
      %p54 = scmp.ne.s32.totalorder %s43, %s44
      %p55 = scmp.eq.s32.totalorder %s21, 0
      %p56 = por %p54, %p55
      %p57 = scmp.ne.s32.totalorder %s43, %s44
      %p58 = scmp.eq.s32.totalorder %s22, 1
      %p59 = por %p57, %p58
      %p61 = scmp.ne.s32.totalorder %s44, %s60
      %p62 = scmp.eq.s32.totalorder %s22, 0
      %p63 = por %p61, %p62
      %s65 = sadd.s32 %s64, 1
      %p68 = scmp.eq.s32.totalorder %s16, 1
      %p69 = scmp.ne.s32.totalorder %s64, %s66
      %p70 = scmp.eq.s32.totalorder %s16, 0
      %p71 = por %p69, %p70
      %p72 = scmp.ne.s32.totalorder %s64, %s66
      %p73 = scmp.eq.s32.totalorder %s21, 1
      %p74 = por %p72, %p73
      %p75 = scmp.ne.s32.totalorder %s66, %s67
      %p76 = scmp.eq.s32.totalorder %s21, 0
      %p77 = por %p75, %p76
      %p78 = scmp.ne.s32.totalorder %s66, %s67
      %p79 = scmp.eq.s32.totalorder %s22, 1
      %p80 = por %p78, %p79
      %p82 = scmp.ne.s32.totalorder %s67, %s81
      %p83 = scmp.eq.s32.totalorder %s22, 0
      %p84 = por %p82, %p83
      %s86 = sadd.s32 %s85, 1
      %p89 = scmp.eq.s32.totalorder %s16, 1
      %p90 = scmp.ne.s32.totalorder %s85, %s87
      %p91 = scmp.eq.s32.totalorder %s16, 0
      %p92 = por %p90, %p91
      %p93 = scmp.ne.s32.totalorder %s85, %s87
      %p94 = scmp.eq.s32.totalorder %s21, 1
      %p95 = por %p93, %p94
      %p96 = scmp.ne.s32.totalorder %s87, %s88
      %p97 = scmp.eq.s32.totalorder %s21, 0
      %p98 = por %p96, %p97
      %p99 = scmp.ne.s32.totalorder %s87, %s88
      %p100 = scmp.eq.s32.totalorder %s22, 1
      %p101 = por %p99, %p100
      %p103 = scmp.ne.s32.totalorder %s88, %s102
      %p104 = scmp.eq.s32.totalorder %s22, 0
      %p105 = por %p103, %p104
      %s106 = ssub.s32 %s23, %s35
      %s107 = ssub.s32 %s24, %s31
      %s108 = sor.u32 %s106, %s107
      %p109 = scmp.eq.s32.totalorder %s108, 0
      %s111 = sadd.s32 %s110, 1
      %s112 = scalar_select %p109, %s110, %s111
      %p115 = pneg %p109
      %p116 = scmp.eq.s32.totalorder %s16, 1
      %p117 = por %p115, %p116
      %p118 = scmp.ne.s32.totalorder %s110, %s113
      %p119 = scmp.eq.s32.totalorder %s16, 0
      %p120 = por %p118, %p119
      %p121 = scmp.ne.s32.totalorder %s110, %s113
      %p122 = scmp.eq.s32.totalorder %s21, 1
      %p123 = por %p121, %p122
      %p124 = scmp.ne.s32.totalorder %s113, %s114
      %p125 = scmp.eq.s32.totalorder %s21, 0
      %p126 = por %p124, %p125
      %p127 = scmp.ne.s32.totalorder %s113, %s114
      %p128 = scmp.eq.s32.totalorder %s22, 1
      %p129 = por %p127, %p128
      %p131 = scmp.ne.s32.totalorder %s114, %s130
      %p132 = scmp.eq.s32.totalorder %s22, 0
      %p133 = por %p131, %p132
      %p134 = scmp.le.s32.totalorder 1, %s16
      %p135 = scmp.lt.s32.totalorder %s16, 3
      %p136 = pnand %p134, %p135
      %p137 = pneg %p136
      // Predicated region
      $region9: #{tpu_custom_call.1} parent=5 // pred_check
        _
      $region10: #{tpu_custom_call.1} parent=5 // pred_check_branch
        %139 = sbr.rel (%p136) target = $region12
      $region11: #{tpu_custom_call.1} parent=5 // pred_region
        %s140 = ssub.s32 %s16, 1
        // Predicated region
        $region13: #{tpu_custom_call.1} parent=11 // pred_check
          %p141 = pneg %p77
        $region14: #{tpu_custom_call.1} parent=11 // pred_check_branch
          %143 = sbr.rel (%p141) target = $region16
        $region15: #{tpu_custom_call.1} parent=11 // pred_region
          %s145 = ssub.s32 64, 64
          %146 = vsyncadd [#allocation6], %s145
          %s148 = sshll.u32 [#allocation5], 4
          %s149 = int_to_ptr.vmem [resolvable:$true] %s148
          %151 = dma.hbm_to_vmem [thread:$0]  %s1, 64, %s149, [#allocation6]
        $region16: #{tpu_custom_call.1} parent=11 // pred_fallthru
          _
        // Predicated region
        $region17: #{tpu_custom_call.1} parent=11 // pred_check
          %p152 = pneg %p98
        $region18: #{tpu_custom_call.1} parent=11 // pred_check_branch
          %154 = sbr.rel (%p152) target = $region20
        $region19: #{tpu_custom_call.1} parent=11 // pred_region
          %s156 = ssub.s32 64, 64
          %157 = vsyncadd [#allocation6], %s156
          %s159 = sshll.u32 [#allocation7], 4
          %s160 = int_to_ptr.vmem [resolvable:$true] %s159
          %162 = dma.hbm_to_vmem [thread:$0]  %s2, 64, %s160, [#allocation6]
        $region20: #{tpu_custom_call.1} parent=11 // pred_fallthru
          _
      $region12: #{tpu_custom_call.1} parent=5 // pred_fallthru
        _
      %p163 = scmp.lt.s32.totalorder %s16, 2
      // Predicated region
      $region21: #{tpu_custom_call.1} parent=5 // pred_check
        %p164 = pneg %p163
      $region22: #{tpu_custom_call.1} parent=5 // pred_check_branch
        %166 = sbr.rel (%p164) target = $region24
      $region23: #{tpu_custom_call.1} parent=5 // pred_region
        // Predicated region
        $region25: #{tpu_custom_call.1} parent=23 // pred_check
          %p167 = pneg %p50
        $region26: #{tpu_custom_call.1} parent=23 // pred_check_branch
          %169 = sbr.rel (%p167) target = $region28
        $region27: #{tpu_custom_call.1} parent=23 // pred_region
          %s170 = sand.u32 %s40, 1
          %s171 = scalar_lea.sflag [#allocation3], %s170
          %s172 = sand.u32 %s40, 1
          %s173 = smul.addr %s172, 8
          %s174 = scalar_lea.vmem [#allocation2], %s173
          %s175 = smul.u32 2, %s24
          %s177 = ssub.s32 128, 128
          %178 = vsyncadd %s171, %s177
          %s179 = smul.addr %s23, 2
          %s180 = sadd.s32 %s175, %s179
          %s181 = smul.addr %s180, 64
          %s182 = scalar_lea.hbm %s0, %s181
          %s184 = sshll.u32 %s174, 4
          %s185 = int_to_ptr.vmem [resolvable:$true] %s184
          %187 = dma.hbm_to_vmem [thread:$0]  %s182, 128, %s185, %s171
        $region28: #{tpu_custom_call.1} parent=23 // pred_fallthru
          _
      $region24: #{tpu_custom_call.1} parent=5 // pred_fallthru
        _
      %p188 = scmp.le.s32.totalorder 1, %s16
      %p189 = scmp.lt.s32.totalorder %s16, 3
      %p190 = pnand %p188, %p189
      %p191 = pneg %p190
      // Predicated region
      $region29: #{tpu_custom_call.1} parent=5 // pred_check
        _
      $region30: #{tpu_custom_call.1} parent=5 // pred_check_branch
        %193 = sbr.rel (%p190) target = $region32
      $region31: #{tpu_custom_call.1} parent=5 // pred_region
        %s194 = ssub.s32 %s16, 1
        %s195 = sand.u32 %s43, 1
        %s196 = scalar_lea.sflag [#allocation3], %s195
        %s197 = sand.u32 %s43, 1
        %s198 = smul.addr %s197, 8
        %s199 = scalar_lea.vmem [#allocation2], %s198
        // Predicated region
        $region33: #{tpu_custom_call.1} parent=31 // pred_check
          %p200 = pneg %p56
        $region34: #{tpu_custom_call.1} parent=31 // pred_check_branch
          %202 = sbr.rel (%p200) target = $region36
        $region35: #{tpu_custom_call.1} parent=31 // pred_region
          %203 = dma.done %s196, 128
        $region36: #{tpu_custom_call.1} parent=31 // pred_fallthru
          _
        // Predicated region
        $region37: #{tpu_custom_call.1} parent=31 // pred_check
          %p204 = pneg %p77
        $region38: #{tpu_custom_call.1} parent=31 // pred_check_branch
          %206 = sbr.rel (%p204) target = $region40
        $region39: #{tpu_custom_call.1} parent=31 // pred_region
          %207 = dma.done [#allocation6], 64
        $region40: #{tpu_custom_call.1} parent=31 // pred_fallthru
          _
        // Predicated region
        $region41: #{tpu_custom_call.1} parent=31 // pred_check
          %p208 = pneg %p98
        $region42: #{tpu_custom_call.1} parent=31 // pred_check_branch
          %210 = sbr.rel (%p208) target = $region44
        $region43: #{tpu_custom_call.1} parent=31 // pred_region
          %211 = dma.done [#allocation6], 64
        $region44: #{tpu_custom_call.1} parent=31 // pred_fallthru
          _
        %s212 = sand.u32 %s43, 1
        %s213 = scalar_lea.sflag [#allocation3], %s212
        %s214 = sand.u32 %s43, 1
        %s215 = smul.addr %s214, 8
        %s216 = scalar_lea.vmem [#allocation2], %s215
        %p217 = pneg %p56
        %p218 = pneg %p53
        %p219 = pneg %p77
        %p220 = pneg %p74
        %p221 = pneg %p98
        %p222 = pneg %p95
        %p223 = pneg %p126
        %p224 = pneg %p123
        %s225 = sand.u32 %s113, 1
        %s226 = scalar_lea.sflag [#allocation4], %s225
        %s227 = sand.u32 %s113, 1
        %s228 = smul.addr %s227, 8
        %s229 = scalar_lea.vmem [#allocation8], %s228
        %s230 = smul.u32 2, %s26
        %s231 = smul.u32 2, %s26
        %v232 = vld [vmem:[%s199] sm:$0xff]
        %v234 = vcombine.high %v232, %v232
        %vm236 = vcmask 1043456
        %v237 = vsel %vm236, %v232, 0.0
        %v238 = vrot.slane %v237, 4
        %v239 = vadd.f32 %v237, %v238
        %v240 = vrot.slane %v239, 2
        %v241 = vadd.f32 %v239, %v240
        %v242 = vrot.slane %v241, 1
        %v243 = vadd.f32 %v241, %v242
        %v244 = vsel %vm236, %v234, 0.0
        %v245 = vrot.slane %v244, 4
        %v246 = vadd.f32 %v244, %v245
        %v247 = vrot.slane %v246, 2
        %v248 = vadd.f32 %v246, %v247
        %v249 = vrot.slane %v248, 1
        %v250 = vadd.f32 %v248, %v249
        %v251 = vrcp.pop 4.0
        %v252 = vmul.f32 %v243, %v251
        %v253 = vmul.f32 %v250, %v251
        %v254 = vmul.f32 %v232, %v232
        %v256 = vcombine.high %v254, %v254
        %v258 = vsel %vm236, %v254, 0.0
        %v259 = vrot.slane %v258, 4
        %v260 = vadd.f32 %v258, %v259
        %v261 = vrot.slane %v260, 2
        %v262 = vadd.f32 %v260, %v261
        %v263 = vrot.slane %v262, 1
        %v264 = vadd.f32 %v262, %v263
        %v265 = vsel %vm236, %v256, 0.0
        %v266 = vrot.slane %v265, 4
        %v267 = vadd.f32 %v265, %v266
        %v268 = vrot.slane %v267, 2
        %v269 = vadd.f32 %v267, %v268
        %v270 = vrot.slane %v269, 1
        %v271 = vadd.f32 %v269, %v270
        %v272 = vmul.f32 %v264, %v251
        %v273 = vmul.f32 %v271, %v251
        %v274 = vmul.f32 %v252, %v252
        %v275 = vmul.f32 %v253, %v253
        %v276 = vsub.f32 %v272, %v274
        %v277 = vsub.f32 %v273, %v275
        %v278 = vmax.f32 %v276, 0.0
        %v279 = vmax.f32 %v277, 0.0
        %v282 = vcombine.low %v252, %v253
        %v284 = vsub.f32 %v232, %v282
        %v285 = vadd.f32 %v278, 1e-06
        %v286 = vadd.f32 %v279, 1e-06
        %v287 = vrsqrt.pop %v285
        %v288 = vrsqrt.pop %v286
        %v291 = vcombine.low %v287, %v288
        %v293 = vmul.f32 %v284, %v291
        %v294 = vld [vmem:[#allocation5] sm:$0xf]
        %296 = vset.pattern.permute.xlu0 0
        %297 = vperm.xlu0 %296, %v294
        %v298 = vpop.permute.xlu0 %297
        %v301 = vcombine.high %v293, %v293
        %v303 = vmul.f32 %v298, %v293
        %v304 = vmul.f32 %v298, %v301
        %v305 = vld [vmem:[#allocation7] sm:$0xf]
        %307 = vset.pattern.permute.xlu0 0
        %308 = vperm.xlu0 %307, %v305
        %v309 = vpop.permute.xlu0 %308
        %v311 = vadd.f32 %v303, %v309
        %v312 = vadd.f32 %v304, %v309
        %v315 = vcombine.low %v311, %v312
        %317 = vst [vmem:[%s229] sm:$0xff] %v315
        %s318 = sand.u32 %s113, 1
        %s319 = scalar_lea.sflag [#allocation4], %s318
        %s320 = sand.u32 %s113, 1
        %s321 = smul.addr %s320, 8
        %s322 = scalar_lea.vmem [#allocation8], %s321
        // Predicated region
        $region45: #{tpu_custom_call.1} parent=31 // pred_check
          %p323 = pneg %p123
        $region46: #{tpu_custom_call.1} parent=31 // pred_check_branch
          %325 = sbr.rel (%p323) target = $region48
        $region47: #{tpu_custom_call.1} parent=31 // pred_region
          %s326 = smul.u32 2, %s26
          %s328 = ssub.s32 128, 128
          %329 = vsyncadd %s319, %s328
          %s330 = smul.addr %s25, 2
          %s331 = sadd.s32 %s326, %s330
          %s332 = smul.addr %s331, 64
          %s333 = scalar_lea.hbm %s3, %s332
          %s335 = sshll.u32 %s322, 4
          %s336 = int_to_ptr.vmem [resolvable:$true] %s335
          %338 = dma.vmem_to_hbm [thread:$0]  %s336, 128, %s333, %s319
        $region48: #{tpu_custom_call.1} parent=31 // pred_fallthru
          _
      $region32: #{tpu_custom_call.1} parent=5 // pred_fallthru
        _
      %p339 = scmp.le.s32.totalorder 2, %s16
      // Predicated region
      $region49: #{tpu_custom_call.1} parent=5 // pred_check
        %p340 = pneg %p339
      $region50: #{tpu_custom_call.1} parent=5 // pred_check_branch
        %342 = sbr.rel (%p340) target = $region52
      $region51: #{tpu_custom_call.1} parent=5 // pred_region
        %s343 = ssub.s32 %s16, 2
        // Predicated region
        $region53: #{tpu_custom_call.1} parent=51 // pred_check
          %p344 = pneg %p129
        $region54: #{tpu_custom_call.1} parent=51 // pred_check_branch
          %346 = sbr.rel (%p344) target = $region56
        $region55: #{tpu_custom_call.1} parent=51 // pred_region
          %s347 = sand.u32 %s114, 1
          %s348 = scalar_lea.sflag [#allocation4], %s347
          %s349 = sand.u32 %s114, 1
          %s350 = smul.addr %s349, 8
          %s351 = scalar_lea.vmem [#allocation8], %s350
          %352 = dma.done %s348, 128
        $region56: #{tpu_custom_call.1} parent=51 // pred_fallthru
          _
      $region52: #{tpu_custom_call.1} parent=5 // pred_fallthru
        _
    $region6: #{tpu_custom_call.1} parent=1 // loop_footer
      %s20 = sadd.s32 1, %s16
    $region7: #{tpu_custom_call.1} parent=1 // loop_footer_branch
      %15 = sbr.rel target = $region3
    $region8: #{tpu_custom_call.1} parent=1 // loop_exit
      _
    %353 = vsyncpa [#allocation3], 1
    %s354 = scalar_lea.sflag [#allocation3], 1
    %355 = vsyncpa %s354, 1
    %356 = vsyncpa [#allocation6], 1
    %357 = vsyncpa [#allocation4], 1
    %s358 = scalar_lea.sflag [#allocation4], 1
    %359 = vsyncpa %s358, 1

</llo_original>
